<compile_context>
chip_gen: v7x
topology: tpu7x:2x2x1
jax: 0.10.0
libtpu: 0.0.40
codegen_flags: <defaults>
</compile_context>

<pallas_src>
import functools

import jax
import jax.numpy as jnp
from jax.experimental import pallas as pl
from jax.experimental.pallas import tpu as pltpu


def _decoupling_kernel(x_ref, w_ref, b_ref, *out_refs, out_dim):
    # One fused (B, D) @ (D, num_tasks*out_dim) matmul covering shared + all tasks.
    # bf16 inputs, f32 accumulation; bias add in f32.
    y = (
        jnp.dot(x_ref[...], w_ref[...], preferred_element_type=jnp.float32)
        + b_ref[...]
    )
    # Static, 128-lane-aligned slices -> one unmasked full-tile store per task.
    for t, o_ref in enumerate(out_refs):
        o_ref[...] = y[:, t * out_dim:(t + 1) * out_dim].astype(o_ref.dtype)


def fuse_decoupling_params(shared_w, shared_b, task_w, task_b,
                           param_dtype=jnp.bfloat16):
    """One-time (module-init) weight/bias fusion.

    shared_w: (D, shared_dim)        shared_b: (shared_dim,)
    task_w:   (T, D, task_rem)       task_b:   (T, task_rem)
    Returns:
      w_all: (D, T*(shared_dim+task_rem)) in `param_dtype` (bf16 by default)
      b_all: (1, T*(shared_dim+task_rem)) in f32
    Layout per task t: [shared_w | task_w[t]] so the concat is baked in.
    """
    num_tasks = task_w.shape[0]
    w_all = jnp.concatenate(
        [jnp.concatenate([shared_w, task_w[t]], axis=1) for t in range(num_tasks)],
        axis=1,
    ).astype(param_dtype)
    b_all = jnp.concatenate(
        [jnp.concatenate([shared_b, task_b[t]], axis=0) for t in range(num_tasks)],
        axis=0,
    ).reshape(1, -1).astype(jnp.float32)
    return w_all, b_all


@functools.partial(jax.jit, static_argnames=("num_tasks", "out_dim"))
def task_specific_decoupling_forward(x, w_all, b_all, *, num_tasks, out_dim):
    """Forward pass: x (B, D) f32, pre-fused w_all/b_all from fuse_decoupling_params.

    Returns list of num_tasks arrays of shape (B, out_dim), f32.
    """
    B, _ = x.shape
    out_dtype = x.dtype
    # bf16 activations to match bf16 weights (halves x DMA; MXU accumulates in f32).
    x_c = x.astype(w_all.dtype)

    vmem_spec = pl.BlockSpec(memory_space=pltpu.MemorySpace.VMEM)
    out_shapes = tuple(
        jax.ShapeDtypeStruct((B, out_dim), out_dtype) for _ in range(num_tasks)
    )
    out_specs = tuple(vmem_spec for _ in range(num_tasks))

    outs = pl.pallas_call(
        functools.partial(_decoupling_kernel, out_dim=out_dim),
        out_shape=out_shapes,
        in_specs=[vmem_spec, vmem_spec, vmem_spec],  # x, fused W, fused b
        out_specs=out_specs,
    )(x_c, w_all, b_all)

    return list(outs)


if __name__ == "__main__":
    # Module hyperparameters (consistent with the PyTorch module).
    input_dim = 32
    shared_ratio = 0.5
    num_tasks = 4
    shared_dim = int(input_dim * shared_ratio)   # 16
    task_dim = 512
    task_rem = task_dim - shared_dim             # 496
    B = 8

    key = jax.random.PRNGKey(0)
    kx, ksw, ksb, ktw, ktb = jax.random.split(key, 5)

    x = jax.random.normal(kx, (B, input_dim), dtype=jnp.float32)
    # Deterministic synthetic parameters (nn.Linear weights stored transposed
    # as (in, out) so the kernel computes x @ W + b).
    shared_w = jax.random.normal(ksw, (input_dim, shared_dim), dtype=jnp.float32) * 0.05
    shared_b = jax.random.normal(ksb, (shared_dim,), dtype=jnp.float32) * 0.05
    task_w = jax.random.normal(ktw, (num_tasks, input_dim, task_rem), dtype=jnp.float32) * 0.05
    task_b = jax.random.normal(ktb, (num_tasks, task_rem), dtype=jnp.float32) * 0.05

    # One-time fusion (module init), then a lean forward call.
    w_all, b_all = fuse_decoupling_params(shared_w, shared_b, task_w, task_b)
    w_all = jax.block_until_ready(w_all)
    b_all = jax.block_until_ready(b_all)

    outs = task_specific_decoupling_forward(
        x, w_all, b_all, num_tasks=num_tasks, out_dim=task_dim)
    for o in outs:
        jax.block_until_ready(o)

    # Pure-JAX f32 reference; tolerance widened for bf16 input rounding.
    shared_ref = x @ shared_w + shared_b
    ok = True
    for t in range(num_tasks):
        ref_t = jnp.concatenate([shared_ref, x @ task_w[t] + task_b[t]], axis=1)
        ok = ok and bool(jnp.allclose(outs[t], ref_t, atol=2e-2, rtol=2e-2))
        assert outs[t].shape == (B, task_dim)
        assert outs[t].dtype == jnp.float32

    if ok:
        print("KERNEL_OK")
</pallas_src>

<mosaic_0001>
module attributes {stable_mosaic.version = 11 : i64} {
  func.func @_decoupling_kernel(%arg0: memref<8x32xbf16, #tpu.memory_space<vmem>>, %arg1: memref<32x2048xbf16, #tpu.memory_space<vmem>>, %arg2: memref<1x2048xf32, #tpu.memory_space<vmem>>, %arg3: memref<8x512xf32, #tpu.memory_space<vmem>>, %arg4: memref<8x512xf32, #tpu.memory_space<vmem>>, %arg5: memref<8x512xf32, #tpu.memory_space<vmem>>, %arg6: memref<8x512xf32, #tpu.memory_space<vmem>>) attributes {dimension_semantics = [], scalar_prefetch = 0 : i64, scratch_operands = 0 : i64, tpu.core_type = #tpu.core_type<tc>} {
    %c0 = arith.constant 0 : index
    %c0_0 = arith.constant 0 : index
    %0 = vector.load %arg0[%c0, %c0_0] : memref<8x32xbf16, #tpu.memory_space<vmem>>, vector<8x32xbf16>
    %c0_1 = arith.constant 0 : index
    %c0_2 = arith.constant 0 : index
    %1 = vector.load %arg1[%c0_1, %c0_2] : memref<32x2048xbf16, #tpu.memory_space<vmem>>, vector<32x2048xbf16>
    %cst = arith.constant dense<0.000000e+00> : vector<8x2048xf32>
    %2 = tpu.matmul %0, %1, %cst {dimension_numbers = #tpu.dot_dimension_numbers<[1], [0], [0], [1], [0, 0, 1, 1], [], []>} : vector<8x32xbf16>, vector<32x2048xbf16>, vector<8x2048xf32> -> vector<8x2048xf32>
    %c0_3 = arith.constant 0 : index
    %c0_4 = arith.constant 0 : index
    %3 = vector.load %arg2[%c0_3, %c0_4] : memref<1x2048xf32, #tpu.memory_space<vmem>>, vector<1x2048xf32>
    %4 = vector.broadcast %3 : vector<1x2048xf32> to vector<8x2048xf32>
    %5 = arith.addf %2, %4 : vector<8x2048xf32>
    %6 = vector.extract_strided_slice %5 {offsets = [0, 0], sizes = [8, 512], strides = [1, 1]} : vector<8x2048xf32> to vector<8x512xf32>
    %c0_5 = arith.constant 0 : index
    %c0_6 = arith.constant 0 : index
    %7 = vector.load %arg3[%c0_5, %c0_6] : memref<8x512xf32, #tpu.memory_space<vmem>>, vector<8x512xf32>
    tpu.vector_store %arg3[%c0_5, %c0_6], %6 {strides = array<i32>} : memref<8x512xf32, #tpu.memory_space<vmem>>, vector<8x512xf32>,
    %8 = vector.extract_strided_slice %5 {offsets = [0, 512], sizes = [8, 512], strides = [1, 1]} : vector<8x2048xf32> to vector<8x512xf32>
    %c0_7 = arith.constant 0 : index
    %c0_8 = arith.constant 0 : index
    %9 = vector.load %arg4[%c0_7, %c0_8] : memref<8x512xf32, #tpu.memory_space<vmem>>, vector<8x512xf32>
    tpu.vector_store %arg4[%c0_7, %c0_8], %8 {strides = array<i32>} : memref<8x512xf32, #tpu.memory_space<vmem>>, vector<8x512xf32>,
    %10 = vector.extract_strided_slice %5 {offsets = [0, 1024], sizes = [8, 512], strides = [1, 1]} : vector<8x2048xf32> to vector<8x512xf32>
    %c0_9 = arith.constant 0 : index
    %c0_10 = arith.constant 0 : index
    %11 = vector.load %arg5[%c0_9, %c0_10] : memref<8x512xf32, #tpu.memory_space<vmem>>, vector<8x512xf32>
    tpu.vector_store %arg5[%c0_9, %c0_10], %10 {strides = array<i32>} : memref<8x512xf32, #tpu.memory_space<vmem>>, vector<8x512xf32>,
    %12 = vector.extract_strided_slice %5 {offsets = [0, 1536], sizes = [8, 512], strides = [1, 1]} : vector<8x2048xf32> to vector<8x512xf32>
    %c0_11 = arith.constant 0 : index
    %c0_12 = arith.constant 0 : index
    %13 = vector.load %arg6[%c0_11, %c0_12] : memref<8x512xf32, #tpu.memory_space<vmem>>, vector<8x512xf32>
    tpu.vector_store %arg6[%c0_11, %c0_12], %12 {strides = array<i32>} : memref<8x512xf32, #tpu.memory_space<vmem>>, vector<8x512xf32>,
    return
  }
}

</mosaic_0001>

<llo_original>
// kernel: task_specific_decoupling_forward.1
$region0: #{task_specific_decoupling_forward.1}
  #allocation0 [shape = 'u32[]', space=smem, size = 0x4, offset = 0x4, fixed_abs, tag = 'smem constant byte address 0x4 - core index']
  #allocation1 [shape = 'u32[144,128]{1,0:T(1,128)}', space=vmem, size = 0x12000, scoped, tag = 'internal scratch']
  %s0 = inlined_call_operand.vmem [shape: bf16[8,32], index: 0, kind: input, shape index: {}]
  %s1 = inlined_call_operand.hbm [shape: bf16[32,2048], index: 1, kind: input, shape index: {}]
  %s2 = inlined_call_operand.vmem [shape: f32[1,2048], index: 2, kind: input, shape index: {}]
  %s3 = inlined_call_operand.hbm [shape: f32[8,512], index: 3, kind: output, shape index: {0}]
  %s4 = inlined_call_operand.hbm [shape: f32[8,512], index: 4, kind: output, shape index: {1}]
  %s5 = inlined_call_operand.hbm [shape: f32[8,512], index: 5, kind: output, shape index: {2}]
  %s6 = inlined_call_operand.hbm [shape: f32[8,512], index: 6, kind: output, shape index: {3}]
  %7 = xla_tuple %s3, %s4, %s5, %s6
  %s8 = sld [smem:[#allocation0]]
  $region50: #{task_specific_decoupling_forward.1} parent=0
    _
  %s10 = ssub.s32 1, %s8
  %s11 = scalar_select 0, %s10, %s8
  $region1: #{task_specific_decoupling_forward.1} parent=0
    #allocation2 [shape = 'u8[131072]{0}', space=vmem, size = 0x20000, scoped, tag = 'input window, operand 1, single buffered']
    #allocation3 [shape = 's32[1]{0}', space=sflag, size = 0x4, scoped, tag = 'scoped memory for task_specific_decoupling_forward.1']
    #allocation4 [shape = 's32[1]{0}', space=sflag, size = 0x4, scoped, tag = 'scoped memory for task_specific_decoupling_forward.1']
    #allocation5 [shape = 'u8[16384]{0}', space=vmem, size = 0x4000, scoped, tag = 'output window, operand 0, single buffered']
    #allocation6 [shape = 'u8[16384]{0}', space=vmem, size = 0x4000, scoped, tag = 'output window, operand 1, single buffered']
    #allocation7 [shape = 's32[1]{0}', space=sflag, size = 0x4, scoped, tag = 'scoped memory for task_specific_decoupling_forward.1']
    #allocation8 [shape = 'u8[16384]{0}', space=vmem, size = 0x4000, scoped, tag = 'output window, operand 2, single buffered']
    #allocation9 [shape = 'u8[16384]{0}', space=vmem, size = 0x4000, scoped, tag = 'output window, operand 3, single buffered']
    #allocation10 [shape = 's32[1]{0}', space=sflag, size = 0x4, scoped, tag = 'scoped memory for task_specific_decoupling_forward.1']
    %12 = vsyncpa [#allocation3], 0
    %13 = vsyncpa [#allocation4], 0
    %14 = vsyncpa [#allocation7], 0
    %15 = vsyncpa [#allocation10], 0
    // Predicated region
    $region2: #{task_specific_decoupling_forward.1} parent=1 // pred_check
      _
    $region3: #{task_specific_decoupling_forward.1} parent=1 // pred_check_branch
      %17 = sbr.rel (0) target = $region5
    $region4: #{task_specific_decoupling_forward.1} parent=1 // pred_region
      _
    $region5: #{task_specific_decoupling_forward.1} parent=1 // pred_fallthru
      _
    // Predicated region
    $region6: #{task_specific_decoupling_forward.1} parent=1 // pred_check
      _
    $region7: #{task_specific_decoupling_forward.1} parent=1 // pred_check_branch
      %19 = sbr.rel (0) target = $region9
    $region8: #{task_specific_decoupling_forward.1} parent=1 // pred_region
      %s21 = ssub.s32 4096, 4096
      %22 = vsyncadd [#allocation3], %s21
      %s23 = sshll.u32 [#allocation2], 4
      %s24 = int_to_ptr.vmem [resolvable:$true] %s23
      %29 = dma.hbm_to_vmem [thread:$0]  %s1, 4096, %s24, [#allocation3], 1024, 1024, 64
    $region9: #{task_specific_decoupling_forward.1} parent=1 // pred_fallthru
      _
    // Predicated region
    $region10: #{task_specific_decoupling_forward.1} parent=1 // pred_check
      _
    $region11: #{task_specific_decoupling_forward.1} parent=1 // pred_check_branch
      %31 = sbr.rel (0) target = $region13
    $region12: #{task_specific_decoupling_forward.1} parent=1 // pred_region
      _
    $region13: #{task_specific_decoupling_forward.1} parent=1 // pred_fallthru
      _
    // Predicated region
    $region14: #{task_specific_decoupling_forward.1} parent=1 // pred_check
      _
    $region15: #{task_specific_decoupling_forward.1} parent=1 // pred_check_branch
      %33 = sbr.rel (0) target = $region17
    $region16: #{task_specific_decoupling_forward.1} parent=1 // pred_region
      %34 = dma.done [#allocation3], 4096
    $region17: #{task_specific_decoupling_forward.1} parent=1 // pred_fallthru
      _
    %v36 = vld [vmem:[%s0] sm:$0xf]
    %v37 = vld [vmem:[#allocation2] sm:$0xff]
    %v38 = vld [vmem:[#allocation2 + $0x8] sm:$0xff]
    %v39 = vld [vmem:[#allocation2 + $0x10] sm:$0xff]
    %v40 = vld [vmem:[#allocation2 + $0x18] sm:$0xff]
    %v41 = vld [vmem:[#allocation2 + $0x20] sm:$0xff]
    %v42 = vld [vmem:[#allocation2 + $0x28] sm:$0xff]
    %v43 = vld [vmem:[#allocation2 + $0x30] sm:$0xff]
    %v44 = vld [vmem:[#allocation2 + $0x38] sm:$0xff]
    %v45 = vld [vmem:[#allocation2 + $0x40] sm:$0xff]
    %v46 = vld [vmem:[#allocation2 + $0x48] sm:$0xff]
    %v47 = vld [vmem:[#allocation2 + $0x50] sm:$0xff]
    %v48 = vld [vmem:[#allocation2 + $0x58] sm:$0xff]
    %v49 = vld [vmem:[#allocation2 + $0x60] sm:$0xff]
    %v50 = vld [vmem:[#allocation2 + $0x68] sm:$0xff]
    %v51 = vld [vmem:[#allocation2 + $0x70] sm:$0xff]
    %v52 = vld [vmem:[#allocation2 + $0x78] sm:$0xff]
    %v53 = vld [vmem:[#allocation2 + $0x80] sm:$0xff]
    %v54 = vld [vmem:[#allocation2 + $0x88] sm:$0xff]
    %v55 = vld [vmem:[#allocation2 + $0x90] sm:$0xff]
    %v56 = vld [vmem:[#allocation2 + $0x98] sm:$0xff]
    %v57 = vld [vmem:[#allocation2 + $0xa0] sm:$0xff]
    %v58 = vld [vmem:[#allocation2 + $0xa8] sm:$0xff]
    %v59 = vld [vmem:[#allocation2 + $0xb0] sm:$0xff]
    %v60 = vld [vmem:[#allocation2 + $0xb8] sm:$0xff]
    %v61 = vld [vmem:[#allocation2 + $0xc0] sm:$0xff]
    %v62 = vld [vmem:[#allocation2 + $0xc8] sm:$0xff]
    %v63 = vld [vmem:[#allocation2 + $0xd0] sm:$0xff]
    %v64 = vld [vmem:[#allocation2 + $0xd8] sm:$0xff]
    %v65 = vld [vmem:[#allocation2 + $0xe0] sm:$0xff]
    %v66 = vld [vmem:[#allocation2 + $0xe8] sm:$0xff]
    %v67 = vld [vmem:[#allocation2 + $0xf0] sm:$0xff]
    %v68 = vld [vmem:[#allocation2 + $0xf8] sm:$0xff]
    %v69 = vld [vmem:[%s2] sm:$0xff]
    %v70 = vld [vmem:[%s2 + $0x8] sm:$0xff]
    %v73 = vlaneseq
    %v74 = vshrl.u32 %v73, 7
    %v75 = vsub.s32 0, %v74
    %v76 = vrot.slane %v69, %v75
    %v77 = vlaneseq
    %v78 = vshrl.u32 %v77, 7
    %v79 = vsub.s32 1, %v78
    %v80 = vrot.slane %v69, %v79
    %v81 = vlaneseq
    %v82 = vshrl.u32 %v81, 7
    %v83 = vsub.s32 2, %v82
    %v84 = vrot.slane %v69, %v83
    %v85 = vlaneseq
    %v86 = vshrl.u32 %v85, 7
    %v87 = vsub.s32 3, %v86
    %v88 = vrot.slane %v69, %v87
    %v89 = vlaneseq
    %v90 = vshrl.u32 %v89, 7
    %v91 = vsub.s32 4, %v90
    %v92 = vrot.slane %v69, %v91
    %v93 = vlaneseq
    %v94 = vshrl.u32 %v93, 7
    %v95 = vsub.s32 5, %v94
    %v96 = vrot.slane %v69, %v95
    %v97 = vlaneseq
    %v98 = vshrl.u32 %v97, 7
    %v99 = vsub.s32 6, %v98
    %v100 = vrot.slane %v69, %v99
    %v101 = vlaneseq
    %v102 = vshrl.u32 %v101, 7
    %v103 = vsub.s32 7, %v102
    %v104 = vrot.slane %v69, %v103
    %v105 = vlaneseq
    %v106 = vshrl.u32 %v105, 7
    %v107 = vsub.s32 0, %v106
    %v108 = vrot.slane %v70, %v107
    %v109 = vlaneseq
    %v110 = vshrl.u32 %v109, 7
    %v111 = vsub.s32 1, %v110
    %v112 = vrot.slane %v70, %v111
    %v113 = vlaneseq
    %v114 = vshrl.u32 %v113, 7
    %v115 = vsub.s32 2, %v114
    %v116 = vrot.slane %v70, %v115
    %v117 = vlaneseq
    %v118 = vshrl.u32 %v117, 7
    %v119 = vsub.s32 3, %v118
    %v120 = vrot.slane %v70, %v119
    %v121 = vlaneseq
    %v122 = vshrl.u32 %v121, 7
    %v123 = vsub.s32 4, %v122
    %v124 = vrot.slane %v70, %v123
    %v125 = vlaneseq
    %v126 = vshrl.u32 %v125, 7
    %v127 = vsub.s32 5, %v126
    %v128 = vrot.slane %v70, %v127
    %v129 = vlaneseq
    %v130 = vshrl.u32 %v129, 7
    %v131 = vsub.s32 6, %v130
    %v132 = vrot.slane %v70, %v131
    %v133 = vlaneseq
    %v134 = vshrl.u32 %v133, 7
    %v135 = vsub.s32 7, %v134
    %v136 = vrot.slane %v70, %v135
    %v185 = vunpack.c.l.b16 %v37
    %v186 = vunpack.c.h.b16 %v37
    %v187 = vunpack.c.l.b16 %v38
    %v188 = vunpack.c.h.b16 %v38
    %v189 = vunpack.c.l.b16 %v39
    %v190 = vunpack.c.h.b16 %v39
    %v191 = vunpack.c.l.b16 %v40
    %v192 = vunpack.c.h.b16 %v40
    %v193 = vunpack.c.l.b16 %v41
    %v194 = vunpack.c.h.b16 %v41
    %v195 = vunpack.c.l.b16 %v42
    %v196 = vunpack.c.h.b16 %v42
    %v197 = vunpack.c.l.b16 %v43
    %v198 = vunpack.c.h.b16 %v43
    %v199 = vunpack.c.l.b16 %v44
    %v200 = vunpack.c.h.b16 %v44
    %v201 = vunpack.c.l.b16 %v45
    %v202 = vunpack.c.h.b16 %v45
    %v203 = vunpack.c.l.b16 %v46
    %v204 = vunpack.c.h.b16 %v46
    %v205 = vunpack.c.l.b16 %v47
    %v206 = vunpack.c.h.b16 %v47
    %v207 = vunpack.c.l.b16 %v48
    %v208 = vunpack.c.h.b16 %v48
    %v209 = vunpack.c.l.b16 %v49
    %v210 = vunpack.c.h.b16 %v49
    %v211 = vunpack.c.l.b16 %v50
    %v212 = vunpack.c.h.b16 %v50
    %v213 = vunpack.c.l.b16 %v51
    %v214 = vunpack.c.h.b16 %v51
    %v215 = vunpack.c.l.b16 %v52
    %v216 = vunpack.c.h.b16 %v52
    %v217 = vunpack.c.l.b16 %v53
    %v218 = vunpack.c.h.b16 %v53
    %v219 = vunpack.c.l.b16 %v54
    %v220 = vunpack.c.h.b16 %v54
    %v221 = vunpack.c.l.b16 %v55
    %v222 = vunpack.c.h.b16 %v55
    %v223 = vunpack.c.l.b16 %v56
    %v224 = vunpack.c.h.b16 %v56
    %v225 = vunpack.c.l.b16 %v57
    %v226 = vunpack.c.h.b16 %v57
    %v227 = vunpack.c.l.b16 %v58
    %v228 = vunpack.c.h.b16 %v58
    %v229 = vunpack.c.l.b16 %v59
    %v230 = vunpack.c.h.b16 %v59
    %v231 = vunpack.c.l.b16 %v60
    %v232 = vunpack.c.h.b16 %v60
    %v233 = vunpack.c.l.b16 %v61
    %v234 = vunpack.c.h.b16 %v61
    %v235 = vunpack.c.l.b16 %v62
    %v236 = vunpack.c.h.b16 %v62
    %v237 = vunpack.c.l.b16 %v63
    %v238 = vunpack.c.h.b16 %v63
    %v239 = vunpack.c.l.b16 %v64
    %v240 = vunpack.c.h.b16 %v64
    %v241 = vunpack.c.l.b16 %v65
    %v242 = vunpack.c.h.b16 %v65
    %v243 = vunpack.c.l.b16 %v66
    %v244 = vunpack.c.h.b16 %v66
    %v245 = vunpack.c.l.b16 %v67
    %v246 = vunpack.c.h.b16 %v67
    %v247 = vunpack.c.l.b16 %v68
    %v248 = vunpack.c.h.b16 %v68
    %v249 = vpack.c.b16 %v201, %v185
    %v250 = vpack.c.b16 %v202, %v186
    %v251 = vpack.c.b16 %v203, %v187
    %v252 = vpack.c.b16 %v204, %v188
    %v253 = vpack.c.b16 %v205, %v189
    %v254 = vpack.c.b16 %v206, %v190
    %v255 = vpack.c.b16 %v207, %v191
    %v256 = vpack.c.b16 %v208, %v192
    %v257 = vpack.c.b16 %v209, %v193
    %v258 = vpack.c.b16 %v210, %v194
    %v259 = vpack.c.b16 %v211, %v195
    %v260 = vpack.c.b16 %v212, %v196
    %v261 = vpack.c.b16 %v213, %v197
    %v262 = vpack.c.b16 %v214, %v198
    %v263 = vpack.c.b16 %v215, %v199
    %v264 = vpack.c.b16 %v216, %v200
    %v265 = vpack.c.b16 %v233, %v217
    %v266 = vpack.c.b16 %v234, %v218
    %v267 = vpack.c.b16 %v235, %v219
    %v268 = vpack.c.b16 %v236, %v220
    %v269 = vpack.c.b16 %v237, %v221
    %v270 = vpack.c.b16 %v238, %v222
    %v271 = vpack.c.b16 %v239, %v223
    %v272 = vpack.c.b16 %v240, %v224
    %v273 = vpack.c.b16 %v241, %v225
    %v274 = vpack.c.b16 %v242, %v226
    %v275 = vpack.c.b16 %v243, %v227
    %v276 = vpack.c.b16 %v244, %v228
    %v277 = vpack.c.b16 %v245, %v229
    %v278 = vpack.c.b16 %v246, %v230
    %v279 = vpack.c.b16 %v247, %v231
    %v280 = vpack.c.b16 %v248, %v232
    %vm313 = vcmask 261120
    %v315 = vsel %vm313, %v36, 0
    %317 = vmatprep.subr.bf16.mxu0 %v250
    %318 = vmatpush1.bf16.msra.mxu0 %v249
    %319 = vmatprep.subr.bf16.mxu0 %v266
    %320 = vmatpush1.bf16.msra.mxu0 %v265
    %321 = vmatprep.subr.bf16.mxu0 0
    %322 = vmatpush1.bf16.msra.mxu0 0
    %323 = vmatprep.subr.bf16.mxu0 0
    %324 = vmatpush1.bf16.msra.mxu0 0
    %325 = vmatprep.subr.bf16.mxu0 0
    %326 = vmatpush1.bf16.msra.mxu0 0
    %327 = vmatprep.subr.bf16.mxu0 0
    %328 = vmatpush1.bf16.msra.mxu0 0
    %329 = vmatprep.subr.bf16.mxu0 0
    %330 = vmatpush1.bf16.msra.mxu0 0
    %331 = vmatprep.subr.bf16.mxu0 0
    %332 = vmatpush1.bf16.msra.mxu0 0
    %333 = vmatprep.subr.bf16.mxu0 0
    %334 = vmatpush1.bf16.msra.mxu0 0
    %335 = vmatprep.subr.bf16.mxu0 0
    %336 = vmatpush1.bf16.msra.mxu0 0
    %337 = vmatprep.subr.bf16.mxu0 0
    %338 = vmatpush1.bf16.msra.mxu0 0
    %339 = vmatprep.subr.bf16.mxu0 0
    %340 = vmatpush1.bf16.msra.mxu0 0
    %341 = vmatprep.subr.bf16.mxu0 0
    %342 = vmatpush1.bf16.msra.mxu0 0
    %343 = vmatprep.subr.bf16.mxu0 0
    %344 = vmatpush1.bf16.msra.mxu0 0
    %345 = vmatprep.subr.bf16.mxu0 0
    %346 = vmatpush1.bf16.msra.mxu0 0
    %347 = vmatprep.subr.bf16.mxu0 0
    %348 = vmatpush1.bf16.msra.mxu0 0
    %349 = vmatprep.mubr.bf16.mxu0 0
    %350 = vmatmul.mubr.bf16.gmra.mrb[0].mxu0 %v315
    %v351 = vpop.f32.mrb[0].mxu0
    %v352 = vadd.f32 %v76, %v351
    %v353 = vpop.f32.mrb[0].mxu0
    %v354 = vadd.f32 %v80, %v353
    %v355 = vpop.f32.mrb[0].mxu0
    %v356 = vpop.f32.mrb[0].mxu0
    %357 = vdwg.mxu0
    %358 = vmatprep.subr.bf16.mxu0 %v252
    %359 = vmatpush1.bf16.msra.mxu0 %v251
    %360 = vmatprep.subr.bf16.mxu0 %v268
    %361 = vmatpush1.bf16.msra.mxu0 %v267
    %362 = vmatprep.subr.bf16.mxu0 0
    %363 = vmatpush1.bf16.msra.mxu0 0
    %364 = vmatprep.subr.bf16.mxu0 0
    %365 = vmatpush1.bf16.msra.mxu0 0
    %366 = vmatprep.subr.bf16.mxu0 0
    %367 = vmatpush1.bf16.msra.mxu0 0
    %368 = vmatprep.subr.bf16.mxu0 0
    %369 = vmatpush1.bf16.msra.mxu0 0
    %370 = vmatprep.subr.bf16.mxu0 0
    %371 = vmatpush1.bf16.msra.mxu0 0
    %372 = vmatprep.subr.bf16.mxu0 0
    %373 = vmatpush1.bf16.msra.mxu0 0
    %374 = vmatprep.subr.bf16.mxu0 0
    %375 = vmatpush1.bf16.msra.mxu0 0
    %376 = vmatprep.subr.bf16.mxu0 0
    %377 = vmatpush1.bf16.msra.mxu0 0
    %378 = vmatprep.subr.bf16.mxu0 0
    %379 = vmatpush1.bf16.msra.mxu0 0
    %380 = vmatprep.subr.bf16.mxu0 0
    %381 = vmatpush1.bf16.msra.mxu0 0
    %382 = vmatprep.subr.bf16.mxu0 0
    %383 = vmatpush1.bf16.msra.mxu0 0
    %384 = vmatprep.subr.bf16.mxu0 0
    %385 = vmatpush1.bf16.msra.mxu0 0
    %386 = vmatprep.subr.bf16.mxu0 0
    %387 = vmatpush1.bf16.msra.mxu0 0
    %388 = vmatprep.subr.bf16.mxu0 0
    %389 = vmatpush1.bf16.msra.mxu0 0
    %390 = vmatprep.mubr.bf16.mxu0 0
    %391 = vmatmul.mubr.bf16.gmra.mrb[0].mxu0 %v315
    %v392 = vpop.f32.mrb[0].mxu0
    %v393 = vadd.f32 %v84, %v392
    %v394 = vpop.f32.mrb[0].mxu0
    %v395 = vadd.f32 %v88, %v394
    %v396 = vpop.f32.mrb[0].mxu0
    %v397 = vpop.f32.mrb[0].mxu0
    %398 = vdwg.mxu0
    %399 = vmatprep.subr.bf16.mxu0 %v254
    %400 = vmatpush1.bf16.msra.mxu0 %v253
    %401 = vmatprep.subr.bf16.mxu0 %v270
    %402 = vmatpush1.bf16.msra.mxu0 %v269
    %403 = vmatprep.subr.bf16.mxu0 0
    %404 = vmatpush1.bf16.msra.mxu0 0
    %405 = vmatprep.subr.bf16.mxu0 0
    %406 = vmatpush1.bf16.msra.mxu0 0
    %407 = vmatprep.subr.bf16.mxu0 0
    %408 = vmatpush1.bf16.msra.mxu0 0
    %409 = vmatprep.subr.bf16.mxu0 0
    %410 = vmatpush1.bf16.msra.mxu0 0
    %411 = vmatprep.subr.bf16.mxu0 0
    %412 = vmatpush1.bf16.msra.mxu0 0
    %413 = vmatprep.subr.bf16.mxu0 0
    %414 = vmatpush1.bf16.msra.mxu0 0
    %415 = vmatprep.subr.bf16.mxu0 0
    %416 = vmatpush1.bf16.msra.mxu0 0
    %417 = vmatprep.subr.bf16.mxu0 0
    %418 = vmatpush1.bf16.msra.mxu0 0
    %419 = vmatprep.subr.bf16.mxu0 0
    %420 = vmatpush1.bf16.msra.mxu0 0
    %421 = vmatprep.subr.bf16.mxu0 0
    %422 = vmatpush1.bf16.msra.mxu0 0
    %423 = vmatprep.subr.bf16.mxu0 0
    %424 = vmatpush1.bf16.msra.mxu0 0
    %425 = vmatprep.subr.bf16.mxu0 0
    %426 = vmatpush1.bf16.msra.mxu0 0
    %427 = vmatprep.subr.bf16.mxu0 0
    %428 = vmatpush1.bf16.msra.mxu0 0
    %429 = vmatprep.subr.bf16.mxu0 0
    %430 = vmatpush1.bf16.msra.mxu0 0
    %431 = vmatprep.mubr.bf16.mxu0 0
    %432 = vmatmul.mubr.bf16.gmra.mrb[0].mxu0 %v315
    %v433 = vpop.f32.mrb[0].mxu0
    %v434 = vadd.f32 %v92, %v433
    %v435 = vpop.f32.mrb[0].mxu0
    %v436 = vadd.f32 %v96, %v435
    %v437 = vpop.f32.mrb[0].mxu0
    %v438 = vpop.f32.mrb[0].mxu0
    %439 = vdwg.mxu0
    %440 = vmatprep.subr.bf16.mxu0 %v256
    %441 = vmatpush1.bf16.msra.mxu0 %v255
    %442 = vmatprep.subr.bf16.mxu0 %v272
    %443 = vmatpush1.bf16.msra.mxu0 %v271
    %444 = vmatprep.subr.bf16.mxu0 0
    %445 = vmatpush1.bf16.msra.mxu0 0
    %446 = vmatprep.subr.bf16.mxu0 0
    %447 = vmatpush1.bf16.msra.mxu0 0
    %448 = vmatprep.subr.bf16.mxu0 0
    %449 = vmatpush1.bf16.msra.mxu0 0
    %450 = vmatprep.subr.bf16.mxu0 0
    %451 = vmatpush1.bf16.msra.mxu0 0
    %452 = vmatprep.subr.bf16.mxu0 0
    %453 = vmatpush1.bf16.msra.mxu0 0
    %454 = vmatprep.subr.bf16.mxu0 0
    %455 = vmatpush1.bf16.msra.mxu0 0
    %456 = vmatprep.subr.bf16.mxu0 0
    %457 = vmatpush1.bf16.msra.mxu0 0
    %458 = vmatprep.subr.bf16.mxu0 0
    %459 = vmatpush1.bf16.msra.mxu0 0
    %460 = vmatprep.subr.bf16.mxu0 0
    %461 = vmatpush1.bf16.msra.mxu0 0
    %462 = vmatprep.subr.bf16.mxu0 0
    %463 = vmatpush1.bf16.msra.mxu0 0
    %464 = vmatprep.subr.bf16.mxu0 0
    %465 = vmatpush1.bf16.msra.mxu0 0
    %466 = vmatprep.subr.bf16.mxu0 0
    %467 = vmatpush1.bf16.msra.mxu0 0
    %468 = vmatprep.subr.bf16.mxu0 0
    %469 = vmatpush1.bf16.msra.mxu0 0
    %470 = vmatprep.subr.bf16.mxu0 0
    %471 = vmatpush1.bf16.msra.mxu0 0
    %472 = vmatprep.mubr.bf16.mxu0 0
    %473 = vmatmul.mubr.bf16.gmra.mrb[0].mxu0 %v315
    %v474 = vpop.f32.mrb[0].mxu0
    %v475 = vadd.f32 %v100, %v474
    %v476 = vpop.f32.mrb[0].mxu0
    %v477 = vadd.f32 %v104, %v476
    %v478 = vpop.f32.mrb[0].mxu0
    %v479 = vpop.f32.mrb[0].mxu0
    %480 = vdwg.mxu0
    %481 = vmatprep.subr.bf16.mxu0 %v258
    %482 = vmatpush1.bf16.msra.mxu0 %v257
    %483 = vmatprep.subr.bf16.mxu0 %v274
    %484 = vmatpush1.bf16.msra.mxu0 %v273
    %485 = vmatprep.subr.bf16.mxu0 0
    %486 = vmatpush1.bf16.msra.mxu0 0
    %487 = vmatprep.subr.bf16.mxu0 0
    %488 = vmatpush1.bf16.msra.mxu0 0
    %489 = vmatprep.subr.bf16.mxu0 0
    %490 = vmatpush1.bf16.msra.mxu0 0
    %491 = vmatprep.subr.bf16.mxu0 0
    %492 = vmatpush1.bf16.msra.mxu0 0
    %493 = vmatprep.subr.bf16.mxu0 0
    %494 = vmatpush1.bf16.msra.mxu0 0
    %495 = vmatprep.subr.bf16.mxu0 0
    %496 = vmatpush1.bf16.msra.mxu0 0
    %497 = vmatprep.subr.bf16.mxu0 0
    %498 = vmatpush1.bf16.msra.mxu0 0
    %499 = vmatprep.subr.bf16.mxu0 0
    %500 = vmatpush1.bf16.msra.mxu0 0
    %501 = vmatprep.subr.bf16.mxu0 0
    %502 = vmatpush1.bf16.msra.mxu0 0
    %503 = vmatprep.subr.bf16.mxu0 0
    %504 = vmatpush1.bf16.msra.mxu0 0
    %505 = vmatprep.subr.bf16.mxu0 0
    %506 = vmatpush1.bf16.msra.mxu0 0
    %507 = vmatprep.subr.bf16.mxu0 0
    %508 = vmatpush1.bf16.msra.mxu0 0
    %509 = vmatprep.subr.bf16.mxu0 0
    %510 = vmatpush1.bf16.msra.mxu0 0
    %511 = vmatprep.subr.bf16.mxu0 0
    %512 = vmatpush1.bf16.msra.mxu0 0
    %513 = vmatprep.mubr.bf16.mxu0 0
    %514 = vmatmul.mubr.bf16.gmra.mrb[0].mxu0 %v315
    %v515 = vpop.f32.mrb[0].mxu0
    %v516 = vadd.f32 %v108, %v515
    %v517 = vpop.f32.mrb[0].mxu0
    %v518 = vadd.f32 %v112, %v517
    %v519 = vpop.f32.mrb[0].mxu0
    %v520 = vpop.f32.mrb[0].mxu0
    %521 = vdwg.mxu0
    %522 = vmatprep.subr.bf16.mxu0 %v260
    %523 = vmatpush1.bf16.msra.mxu0 %v259
    %524 = vmatprep.subr.bf16.mxu0 %v276
    %525 = vmatpush1.bf16.msra.mxu0 %v275
    %526 = vmatprep.subr.bf16.mxu0 0
    %527 = vmatpush1.bf16.msra.mxu0 0
    %528 = vmatprep.subr.bf16.mxu0 0
    %529 = vmatpush1.bf16.msra.mxu0 0
    %530 = vmatprep.subr.bf16.mxu0 0
    %531 = vmatpush1.bf16.msra.mxu0 0
    %532 = vmatprep.subr.bf16.mxu0 0
    %533 = vmatpush1.bf16.msra.mxu0 0
    %534 = vmatprep.subr.bf16.mxu0 0
    %535 = vmatpush1.bf16.msra.mxu0 0
    %536 = vmatprep.subr.bf16.mxu0 0
    %537 = vmatpush1.bf16.msra.mxu0 0
    %538 = vmatprep.subr.bf16.mxu0 0
    %539 = vmatpush1.bf16.msra.mxu0 0
    %540 = vmatprep.subr.bf16.mxu0 0
    %541 = vmatpush1.bf16.msra.mxu0 0
    %542 = vmatprep.subr.bf16.mxu0 0
    %543 = vmatpush1.bf16.msra.mxu0 0
    %544 = vmatprep.subr.bf16.mxu0 0
    %545 = vmatpush1.bf16.msra.mxu0 0
    %546 = vmatprep.subr.bf16.mxu0 0
    %547 = vmatpush1.bf16.msra.mxu0 0
    %548 = vmatprep.subr.bf16.mxu0 0
    %549 = vmatpush1.bf16.msra.mxu0 0
    %550 = vmatprep.subr.bf16.mxu0 0
    %551 = vmatpush1.bf16.msra.mxu0 0
    %552 = vmatprep.subr.bf16.mxu0 0
    %553 = vmatpush1.bf16.msra.mxu0 0
    %554 = vmatprep.mubr.bf16.mxu0 0
    %555 = vmatmul.mubr.bf16.gmra.mrb[0].mxu0 %v315
    %v556 = vpop.f32.mrb[0].mxu0
    %v557 = vadd.f32 %v116, %v556
    %v558 = vpop.f32.mrb[0].mxu0
    %v559 = vadd.f32 %v120, %v558
    %v560 = vpop.f32.mrb[0].mxu0
    %v561 = vpop.f32.mrb[0].mxu0
    %562 = vdwg.mxu0
    %563 = vmatprep.subr.bf16.mxu0 %v262
    %564 = vmatpush1.bf16.msra.mxu0 %v261
    %565 = vmatprep.subr.bf16.mxu0 %v278
    %566 = vmatpush1.bf16.msra.mxu0 %v277
    %567 = vmatprep.subr.bf16.mxu0 0
    %568 = vmatpush1.bf16.msra.mxu0 0
    %569 = vmatprep.subr.bf16.mxu0 0
    %570 = vmatpush1.bf16.msra.mxu0 0
    %571 = vmatprep.subr.bf16.mxu0 0
    %572 = vmatpush1.bf16.msra.mxu0 0
    %573 = vmatprep.subr.bf16.mxu0 0
    %574 = vmatpush1.bf16.msra.mxu0 0
    %575 = vmatprep.subr.bf16.mxu0 0
    %576 = vmatpush1.bf16.msra.mxu0 0
    %577 = vmatprep.subr.bf16.mxu0 0
    %578 = vmatpush1.bf16.msra.mxu0 0
    %579 = vmatprep.subr.bf16.mxu0 0
    %580 = vmatpush1.bf16.msra.mxu0 0
    %581 = vmatprep.subr.bf16.mxu0 0
    %582 = vmatpush1.bf16.msra.mxu0 0
    %583 = vmatprep.subr.bf16.mxu0 0
    %584 = vmatpush1.bf16.msra.mxu0 0
    %585 = vmatprep.subr.bf16.mxu0 0
    %586 = vmatpush1.bf16.msra.mxu0 0
    %587 = vmatprep.subr.bf16.mxu0 0
    %588 = vmatpush1.bf16.msra.mxu0 0
    %589 = vmatprep.subr.bf16.mxu0 0
    %590 = vmatpush1.bf16.msra.mxu0 0
    %591 = vmatprep.subr.bf16.mxu0 0
    %592 = vmatpush1.bf16.msra.mxu0 0
    %593 = vmatprep.subr.bf16.mxu0 0
    %594 = vmatpush1.bf16.msra.mxu0 0
    %595 = vmatprep.mubr.bf16.mxu0 0
    %596 = vmatmul.mubr.bf16.gmra.mrb[0].mxu0 %v315
    %v597 = vpop.f32.mrb[0].mxu0
    %v598 = vadd.f32 %v124, %v597
    %v599 = vpop.f32.mrb[0].mxu0
    %v600 = vadd.f32 %v128, %v599
    %v601 = vpop.f32.mrb[0].mxu0
    %v602 = vpop.f32.mrb[0].mxu0
    %603 = vdwg.mxu0
    %604 = vmatprep.subr.bf16.mxu0 %v264
    %605 = vmatpush1.bf16.msra.mxu0 %v263
    %606 = vmatprep.subr.bf16.mxu0 %v280
    %607 = vmatpush1.bf16.msra.mxu0 %v279
    %608 = vmatprep.subr.bf16.mxu0 0
    %609 = vmatpush1.bf16.msra.mxu0 0
    %610 = vmatprep.subr.bf16.mxu0 0
    %611 = vmatpush1.bf16.msra.mxu0 0
    %612 = vmatprep.subr.bf16.mxu0 0
    %613 = vmatpush1.bf16.msra.mxu0 0
    %614 = vmatprep.subr.bf16.mxu0 0
    %615 = vmatpush1.bf16.msra.mxu0 0
    %616 = vmatprep.subr.bf16.mxu0 0
    %617 = vmatpush1.bf16.msra.mxu0 0
    %618 = vmatprep.subr.bf16.mxu0 0
    %619 = vmatpush1.bf16.msra.mxu0 0
    %620 = vmatprep.subr.bf16.mxu0 0
    %621 = vmatpush1.bf16.msra.mxu0 0
    %622 = vmatprep.subr.bf16.mxu0 0
    %623 = vmatpush1.bf16.msra.mxu0 0
    %624 = vmatprep.subr.bf16.mxu0 0
    %625 = vmatpush1.bf16.msra.mxu0 0
    %626 = vmatprep.subr.bf16.mxu0 0
    %627 = vmatpush1.bf16.msra.mxu0 0
    %628 = vmatprep.subr.bf16.mxu0 0
    %629 = vmatpush1.bf16.msra.mxu0 0
    %630 = vmatprep.subr.bf16.mxu0 0
    %631 = vmatpush1.bf16.msra.mxu0 0
    %632 = vmatprep.subr.bf16.mxu0 0
    %633 = vmatpush1.bf16.msra.mxu0 0
    %634 = vmatprep.subr.bf16.mxu0 0
    %635 = vmatpush1.bf16.msra.mxu0 0
    %636 = vmatprep.mubr.bf16.mxu0 0
    %637 = vmatmul.mubr.bf16.gmra.mrb[0].mxu0 %v315
    %v638 = vpop.f32.mrb[0].mxu0
    %v639 = vadd.f32 %v132, %v638
    %v640 = vpop.f32.mrb[0].mxu0
    %v641 = vadd.f32 %v136, %v640
    %v642 = vpop.f32.mrb[0].mxu0
    %v643 = vpop.f32.mrb[0].mxu0
    %644 = vdwg.mxu0
    %645 = vst [vmem:[#allocation5] sm:$0xff] %v352
    %646 = vst [vmem:[#allocation5 + $0x8] sm:$0xff] %v354
    %647 = vst [vmem:[#allocation5 + $0x10] sm:$0xff] %v393
    %648 = vst [vmem:[#allocation5 + $0x18] sm:$0xff] %v395
    %649 = vst [vmem:[#allocation6] sm:$0xff] %v434
    %650 = vst [vmem:[#allocation6 + $0x8] sm:$0xff] %v436
    %651 = vst [vmem:[#allocation6 + $0x10] sm:$0xff] %v475
    %652 = vst [vmem:[#allocation6 + $0x18] sm:$0xff] %v477
    %653 = vst [vmem:[#allocation8] sm:$0xff] %v516
    %654 = vst [vmem:[#allocation8 + $0x8] sm:$0xff] %v518
    %655 = vst [vmem:[#allocation8 + $0x10] sm:$0xff] %v557
    %656 = vst [vmem:[#allocation8 + $0x18] sm:$0xff] %v559
    %657 = vst [vmem:[#allocation9] sm:$0xff] %v598
    %658 = vst [vmem:[#allocation9 + $0x8] sm:$0xff] %v600
    %659 = vst [vmem:[#allocation9 + $0x10] sm:$0xff] %v639
    %660 = vst [vmem:[#allocation9 + $0x18] sm:$0xff] %v641
    // Predicated region
    $region18: #{task_specific_decoupling_forward.1} parent=1 // pred_check
      _
    $region19: #{task_specific_decoupling_forward.1} parent=1 // pred_check_branch
      %662 = sbr.rel (0) target = $region21
    $region20: #{task_specific_decoupling_forward.1} parent=1 // pred_region
      %s664 = ssub.s32 512, 512
      %665 = vsyncadd [#allocation4], %s664
      %s667 = sshll.u32 [#allocation5], 4
      %s668 = int_to_ptr.vmem [resolvable:$true] %s667
      %670 = dma.vmem_to_hbm [thread:$0]  %s668, 512, %s3, [#allocation4]
    $region21: #{task_specific_decoupling_forward.1} parent=1 // pred_fallthru
      _
    // Predicated region
    $region22: #{task_specific_decoupling_forward.1} parent=1 // pred_check
      _
    $region23: #{task_specific_decoupling_forward.1} parent=1 // pred_check_branch
      %672 = sbr.rel (0) target = $region25
    $region24: #{task_specific_decoupling_forward.1} parent=1 // pred_region
      %s674 = ssub.s32 512, 512
      %675 = vsyncadd [#allocation7], %s674
      %s677 = sshll.u32 [#allocation6], 4
      %s678 = int_to_ptr.vmem [resolvable:$true] %s677
      %680 = dma.vmem_to_hbm [thread:$0]  %s678, 512, %s4, [#allocation7]
    $region25: #{task_specific_decoupling_forward.1} parent=1 // pred_fallthru
      _
    // Predicated region
    $region26: #{task_specific_decoupling_forward.1} parent=1 // pred_check
      _
    $region27: #{task_specific_decoupling_forward.1} parent=1 // pred_check_branch
      %682 = sbr.rel (0) target = $region29
    $region28: #{task_specific_decoupling_forward.1} parent=1 // pred_region
      %s684 = ssub.s32 512, 512
      %685 = vsyncadd [#allocation7], %s684
      %s687 = sshll.u32 [#allocation8], 4
      %s688 = int_to_ptr.vmem [resolvable:$true] %s687
      %690 = dma.vmem_to_hbm [thread:$0]  %s688, 512, %s5, [#allocation7]
    $region29: #{task_specific_decoupling_forward.1} parent=1 // pred_fallthru
      _
    // Predicated region
    $region30: #{task_specific_decoupling_forward.1} parent=1 // pred_check
      _
    $region31: #{task_specific_decoupling_forward.1} parent=1 // pred_check_branch
      %692 = sbr.rel (0) target = $region33
    $region32: #{task_specific_decoupling_forward.1} parent=1 // pred_region
      %s694 = ssub.s32 512, 512
      %695 = vsyncadd [#allocation10], %s694
      %s697 = sshll.u32 [#allocation9], 4
      %s698 = int_to_ptr.vmem [resolvable:$true] %s697
      %700 = dma.vmem_to_hbm [thread:$0]  %s698, 512, %s6, [#allocation10]
    $region33: #{task_specific_decoupling_forward.1} parent=1 // pred_fallthru
      _
    // Predicated region
    $region34: #{task_specific_decoupling_forward.1} parent=1 // pred_check
      _
    $region35: #{task_specific_decoupling_forward.1} parent=1 // pred_check_branch
      %702 = sbr.rel (0) target = $region37
    $region36: #{task_specific_decoupling_forward.1} parent=1 // pred_region
      %703 = dma.done [#allocation4], 512
    $region37: #{task_specific_decoupling_forward.1} parent=1 // pred_fallthru
      _
    // Predicated region
    $region38: #{task_specific_decoupling_forward.1} parent=1 // pred_check
      _
    $region39: #{task_specific_decoupling_forward.1} parent=1 // pred_check_branch
      %705 = sbr.rel (0) target = $region41
    $region40: #{task_specific_decoupling_forward.1} parent=1 // pred_region
      %706 = dma.done [#allocation7], 512
    $region41: #{task_specific_decoupling_forward.1} parent=1 // pred_fallthru
      _
    // Predicated region
    $region42: #{task_specific_decoupling_forward.1} parent=1 // pred_check
      _
    $region43: #{task_specific_decoupling_forward.1} parent=1 // pred_check_branch
      %708 = sbr.rel (0) target = $region45
    $region44: #{task_specific_decoupling_forward.1} parent=1 // pred_region
      %709 = dma.done [#allocation7], 512
    $region45: #{task_specific_decoupling_forward.1} parent=1 // pred_fallthru
      _
    // Predicated region
    $region46: #{task_specific_decoupling_forward.1} parent=1 // pred_check
      _
    $region47: #{task_specific_decoupling_forward.1} parent=1 // pred_check_branch
      %711 = sbr.rel (0) target = $region49
    $region48: #{task_specific_decoupling_forward.1} parent=1 // pred_region
      %712 = dma.done [#allocation10], 512
    $region49: #{task_specific_decoupling_forward.1} parent=1 // pred_fallthru
      _
    %713 = vsyncpa [#allocation3], 1
    %714 = vsyncpa [#allocation4], 1
    %715 = vsyncpa [#allocation7], 1
    %716 = vsyncpa [#allocation10], 1

</llo_original>
